<compile_context>
chip_gen: v7x
topology: tpu7x:2x2x1
jax: 0.10.0
libtpu: 0.0.40
codegen_flags: <defaults>
</compile_context>

<pallas_src>
import functools
import math

import jax
import jax.numpy as jnp
from jax.experimental import pallas as pl
from jax.experimental.pallas import tpu as pltpu

_NEG_BIG = -1e30  # large negative instead of -inf: avoids inf-inf NaN edge cases


def _flash_qkv_kernel(q_ref, k_ref, v_ref, o_ref, m_sc, l_sc, acc_sc, *,
                      scale_sq, seq_len, block_t, needs_mask):
    kv = pl.program_id(2)

    @pl.when(kv == 0)
    def _init():
        m_sc[...] = jnp.full_like(m_sc, _NEG_BIG)
        l_sc[...] = jnp.zeros_like(l_sc)
        acc_sc[...] = jnp.zeros_like(acc_sc)

    q = q_ref[...]          # [hb, tq, C]  (input dtype; bf16 stays bf16)
    k = k_ref[...]          # [hb, tk, C]
    v = v_ref[...]          # [hb, tk, C]

    # scores[h, t, s] = scale^2 * sum_c q[h, t, c] * k[h, s, c]
    s = jnp.einsum("hqc,hkc->hqk", q, k,
                   preferred_element_type=jnp.float32) * scale_sq

    if needs_mask:
        col = kv * block_t + jax.lax.broadcasted_iota(jnp.int32, s.shape, 2)
        s = jnp.where(col < seq_len, s, _NEG_BIG)

    m_prev = m_sc[...]                                          # [hb, tq, 1]
    m_new = jnp.maximum(m_prev, jnp.max(s, axis=-1, keepdims=True))
    alpha = jnp.exp(m_prev - m_new)
    p = jnp.exp(s - m_new)                                      # [hb, tq, tk] f32

    l_sc[...] = alpha * l_sc[...] + jnp.sum(p, axis=-1, keepdims=True)
    acc_sc[...] = alpha * acc_sc[...] + jnp.einsum(
        "hqk,hkc->hqc", p.astype(v.dtype), v,
        preferred_element_type=jnp.float32)
    m_sc[...] = m_new

    @pl.when(kv == pl.num_programs(2) - 1)
    def _finalize():
        inv_l = pl.reciprocal(l_sc[...], approx=True)   # row sums are >= 1
        o_ref[...] = (acc_sc[...] * inv_l).astype(o_ref.dtype)


def qkv_attention(qkv, n_heads, *, block_t=None, head_block=None):
    """Pallas equivalent of QKVAttention.forward.

    :param qkv: [N, 3*H*C, T] array of Qs, Ks and Vs.
    :return: [N, H*C, T] array after attention.
    """
    bs, width, length = qkv.shape
    assert width % (3 * n_heads) == 0
    ch = width // (3 * n_heads)
    scale = 1.0 / math.sqrt(math.sqrt(ch))
    scale_sq = scale * scale            # fold both q- and k-scales into the scores

    B = bs * n_heads

    # --- tile selection ----------------------------------------------------
    if block_t is None:
        # Single block for short sequences; otherwise 256-aligned tiles: fits
        # the 256x256 MXU on v6e/v7x, is 128-aligned for v5e, and stays a few
        # MiB of VMEM even under v7x's 64 MiB budget.
        block_t = length if length <= 512 else 256
    t_pad = pl.cdiv(length, block_t) * block_t

    if head_block is None:
        head_block = 1
        if t_pad // block_t == 1:       # tiny per-head work: pack heads per step
            for cand in (8, 4, 2):
                if B % cand == 0:
                    head_block = cand
                    break
    assert B % head_block == 0

    # --- layout plumbing: [N, 3HC, T] -> three [B, T_pad, C] slabs ----------
    q, k, v = jnp.split(qkv, 3, axis=1)

    def _prep(x):
        x = x.reshape(B, ch, length).transpose(0, 2, 1)          # [B, T, C]
        if t_pad != length:
            x = jnp.pad(x, ((0, 0), (0, t_pad - length), (0, 0)))
        return x

    q, k, v = _prep(q), _prep(k), _prep(v)

    kernel = functools.partial(
        _flash_qkv_kernel, scale_sq=scale_sq, seq_len=length,
        block_t=block_t, needs_mask=(t_pad != length))

    qo_spec = pl.BlockSpec((head_block, block_t, ch), lambda b, qi, ki: (b, qi, 0))
    kv_spec = pl.BlockSpec((head_block, block_t, ch), lambda b, qi, ki: (b, ki, 0))

    out = pl.pallas_call(
        kernel,
        out_shape=jax.ShapeDtypeStruct((B, t_pad, ch), qkv.dtype),
        grid_spec=pltpu.PrefetchScalarGridSpec(
            num_scalar_prefetch=0,
            grid=(B // head_block, t_pad // block_t, t_pad // block_t),
            in_specs=[qo_spec, kv_spec, kv_spec],
            out_specs=qo_spec,
            scratch_shapes=[
                pltpu.VMEM((head_block, block_t, 1), jnp.float32),   # running max
                pltpu.VMEM((head_block, block_t, 1), jnp.float32),   # running sum
                pltpu.VMEM((head_block, block_t, ch), jnp.float32),  # output acc
            ]),
        compiler_params=pltpu.CompilerParams(
            dimension_semantics=("parallel", "parallel", "arbitrary")),
    )(q, k, v)

    out = out[:, :length, :]                                     # drop padded rows
    return out.transpose(0, 2, 1).reshape(bs, n_heads * ch, length)


def _reference_qkv_attention(qkv, n_heads):
    """Pure-JAX reference mirroring the PyTorch forward exactly."""
    bs, width, length = qkv.shape
    ch = width // (3 * n_heads)
    q, k, v = jnp.split(qkv, 3, axis=1)
    scale = 1.0 / math.sqrt(math.sqrt(ch))
    qh = (q * scale).reshape(bs * n_heads, ch, length)
    kh = (k * scale).reshape(bs * n_heads, ch, length)
    vh = v.reshape(bs * n_heads, ch, length)
    w = jnp.einsum("bct,bcs->bts", qh, kh)
    w = jax.nn.softmax(w, axis=-1)
    a = jnp.einsum("bts,bcs->bct", w, vh)
    return a.reshape(bs, -1, length)


if __name__ == "__main__":
    key = jax.random.PRNGKey(0)
    k1, k2 = jax.random.split(key)

    # Case 1: small shapes matching the module (single kv block, heads packed).
    N, H, C, T = 2, 2, 4, 8
    qkv = jax.random.normal(k1, (N, 3 * H * C, T), dtype=jnp.float32)
    out = jax.block_until_ready(qkv_attention(qkv, n_heads=H))
    ref = _reference_qkv_attention(qkv, n_heads=H)
    assert out.shape == (N, H * C, T), out.shape
    assert jnp.allclose(out, ref, atol=2e-3, rtol=2e-3), "mismatch (case 1)"

    # Case 2: exercise the multi-block online-softmax path + kv padding mask
    # (T=20 with block_t=8 -> padded to 24, three kv blocks per q block).
    N2, H2, C2, T2 = 2, 3, 4, 20
    qkv2 = jax.random.normal(k2, (N2, 3 * H2 * C2, T2), dtype=jnp.float32)
    out2 = jax.block_until_ready(
        qkv_attention(qkv2, n_heads=H2, block_t=8, head_block=2))
    ref2 = _reference_qkv_attention(qkv2, n_heads=H2)
    assert out2.shape == (N2, H2 * C2, T2), out2.shape
    assert jnp.allclose(out2, ref2, atol=2e-3, rtol=2e-3), "mismatch (case 2)"

    print("KERNEL_OK")
</pallas_src>

<mosaic_0001>
module attributes {stable_mosaic.version = 11 : i64} {
  func.func @_flash_qkv_kernel(%arg0: i32, %arg1: i32, %arg2: i32, %arg3: memref<4x8x4xf32, #tpu.memory_space<vmem>>, %arg4: memref<4x8x4xf32, #tpu.memory_space<vmem>>, %arg5: memref<4x8x4xf32, #tpu.memory_space<vmem>>, %arg6: memref<4x8x4xf32, #tpu.memory_space<vmem>>, %arg7: memref<4x8x1xf32, #tpu.memory_space<vmem>>, %arg8: memref<4x8x1xf32, #tpu.memory_space<vmem>>, %arg9: memref<4x8x4xf32, #tpu.memory_space<vmem>>) attributes {dimension_semantics = [#tpu.dimension_semantics<parallel>, #tpu.dimension_semantics<parallel>, #tpu.dimension_semantics<arbitrary>], iteration_bounds = array<i64: 1, 1, 1>, scalar_prefetch = 0 : i64, scratch_operands = 3 : i64, tpu.core_type = #tpu.core_type<tc>, window_params = [{transform_indices = @transform_0, window_bounds = array<i64: 4, 8, 4>}, {transform_indices = @transform_1, window_bounds = array<i64: 4, 8, 4>}, {transform_indices = @transform_2, window_bounds = array<i64: 4, 8, 4>}, {transform_indices = @transform_3, window_bounds = array<i64: 4, 8, 4>}]} {
    %c0_i32 = arith.constant 0 : i32
    %0 = arith.cmpi eq, %arg2, %c0_i32 : i32
    %1 = arith.extui %0 : i1 to i32
    %c0_i32_0 = arith.constant 0 : i32
    %2 = arith.cmpi ne, %1, %c0_i32_0 : i32
    scf.if %2 {
      %cst_33 = arith.constant -1.000000e+30 : f32
      %34 = vector.broadcast %cst_33 : f32 to vector<4x8x1xf32>
      %c0_34 = arith.constant 0 : index
      %c0_35 = arith.constant 0 : index
      %c0_36 = arith.constant 0 : index
      %35 = vector.load %arg7[%c0_34, %c0_35, %c0_36] : memref<4x8x1xf32, #tpu.memory_space<vmem>>, vector<4x8x1xf32>
      tpu.vector_store %arg7[%c0_34, %c0_35, %c0_36], %34 {strides = array<i32>} : memref<4x8x1xf32, #tpu.memory_space<vmem>>, vector<4x8x1xf32>,
      %cst_37 = arith.constant 0.000000e+00 : f32
      %36 = vector.broadcast %cst_37 : f32 to vector<4x8x1xf32>
      %c0_38 = arith.constant 0 : index
      %c0_39 = arith.constant 0 : index
      %c0_40 = arith.constant 0 : index
      %37 = vector.load %arg8[%c0_38, %c0_39, %c0_40] : memref<4x8x1xf32, #tpu.memory_space<vmem>>, vector<4x8x1xf32>
      tpu.vector_store %arg8[%c0_38, %c0_39, %c0_40], %36 {strides = array<i32>} : memref<4x8x1xf32, #tpu.memory_space<vmem>>, vector<4x8x1xf32>,
      %cst_41 = arith.constant 0.000000e+00 : f32
      %38 = vector.broadcast %cst_41 : f32 to vector<4x8x4xf32>
      %c0_42 = arith.constant 0 : index
      %c0_43 = arith.constant 0 : index
      %c0_44 = arith.constant 0 : index
      %39 = vector.load %arg9[%c0_42, %c0_43, %c0_44] : memref<4x8x4xf32, #tpu.memory_space<vmem>>, vector<4x8x4xf32>
      tpu.vector_store %arg9[%c0_42, %c0_43, %c0_44], %38 {strides = array<i32>} : memref<4x8x4xf32, #tpu.memory_space<vmem>>, vector<4x8x4xf32>,
    } else {
    }
    %c0 = arith.constant 0 : index
    %c0_1 = arith.constant 0 : index
    %c0_2 = arith.constant 0 : index
    %3 = vector.load %arg3[%c0, %c0_1, %c0_2] : memref<4x8x4xf32, #tpu.memory_space<vmem>>, vector<4x8x4xf32>
    %c0_3 = arith.constant 0 : index
    %c0_4 = arith.constant 0 : index
    %c0_5 = arith.constant 0 : index
    %4 = vector.load %arg4[%c0_3, %c0_4, %c0_5] : memref<4x8x4xf32, #tpu.memory_space<vmem>>, vector<4x8x4xf32>
    %c0_6 = arith.constant 0 : index
    %c0_7 = arith.constant 0 : index
    %c0_8 = arith.constant 0 : index
    %5 = vector.load %arg5[%c0_6, %c0_7, %c0_8] : memref<4x8x4xf32, #tpu.memory_space<vmem>>, vector<4x8x4xf32>
    "tpu.trace_start"() <{level = 10 : i32, message = "hqc,hkc->hqk"}> : () -> ()
    %cst = arith.constant dense<0.000000e+00> : vector<4x8x8xf32>
    %6 = tpu.matmul %3, %4, %cst {dimension_numbers = #tpu.dot_dimension_numbers<[2], [2], [1], [1], [0, 0, 0, 1, 1, 1], [0], [0]>} : vector<4x8x4xf32>, vector<4x8x4xf32>, vector<4x8x8xf32> -> vector<4x8x8xf32>
    "tpu.trace_stop"() : () -> ()
    %cst_9 = arith.constant 5.000000e-01 : f32
    %7 = vector.broadcast %cst_9 : f32 to vector<4x8x8xf32>
    %8 = arith.mulf %6, %7 : vector<4x8x8xf32>
    %c0_10 = arith.constant 0 : index
    %c0_11 = arith.constant 0 : index
    %c0_12 = arith.constant 0 : index
    %9 = vector.load %arg7[%c0_10, %c0_11, %c0_12] : memref<4x8x1xf32, #tpu.memory_space<vmem>>, vector<4x8x1xf32>
    %cst_13 = arith.constant dense<0xFF800000> : vector<4x8xf32>
    %10 = vector.multi_reduction <maximumf>, %8, %cst_13 [2] : vector<4x8x8xf32> to vector<4x8xf32>
    %11 = vector.shape_cast %10 : vector<4x8xf32> to vector<4x8x1xf32>
    %12 = arith.maximumf %9, %11 : vector<4x8x1xf32>
    %13 = arith.subf %9, %12 : vector<4x8x1xf32>
    %14 = math.exp %13 : vector<4x8x1xf32>
    %15 = vector.broadcast %12 : vector<4x8x1xf32> to vector<4x8x8xf32>
    %16 = arith.subf %8, %15 : vector<4x8x8xf32>
    %17 = math.exp %16 : vector<4x8x8xf32>
    %c0_14 = arith.constant 0 : index
    %c0_15 = arith.constant 0 : index
    %c0_16 = arith.constant 0 : index
    %18 = vector.load %arg8[%c0_14, %c0_15, %c0_16] : memref<4x8x1xf32, #tpu.memory_space<vmem>>, vector<4x8x1xf32>
    %19 = arith.mulf %14, %18 : vector<4x8x1xf32>
    %cst_17 = arith.constant dense<0.000000e+00> : vector<4x8xf32>
    %20 = vector.multi_reduction <add>, %17, %cst_17 [2] : vector<4x8x8xf32> to vector<4x8xf32>
    %21 = vector.shape_cast %20 : vector<4x8xf32> to vector<4x8x1xf32>
    %22 = arith.addf %19, %21 : vector<4x8x1xf32>
    %c0_18 = arith.constant 0 : index
    %c0_19 = arith.constant 0 : index
    %c0_20 = arith.constant 0 : index
    %23 = vector.load %arg8[%c0_18, %c0_19, %c0_20] : memref<4x8x1xf32, #tpu.memory_space<vmem>>, vector<4x8x1xf32>
    tpu.vector_store %arg8[%c0_18, %c0_19, %c0_20], %22 {strides = array<i32>} : memref<4x8x1xf32, #tpu.memory_space<vmem>>, vector<4x8x1xf32>,
    %c0_21 = arith.constant 0 : index
    %c0_22 = arith.constant 0 : index
    %c0_23 = arith.constant 0 : index
    %24 = vector.load %arg9[%c0_21, %c0_22, %c0_23] : memref<4x8x4xf32, #tpu.memory_space<vmem>>, vector<4x8x4xf32>
    %25 = vector.broadcast %14 : vector<4x8x1xf32> to vector<4x8x4xf32>
    %26 = arith.mulf %25, %24 : vector<4x8x4xf32>
    "tpu.trace_start"() <{level = 10 : i32, message = "hqk,hkc->hqc"}> : () -> ()
    %cst_24 = arith.constant dense<0.000000e+00> : vector<4x8x4xf32>
    %27 = tpu.matmul %17, %5, %cst_24 {dimension_numbers = #tpu.dot_dimension_numbers<[2], [1], [1], [2], [0, 0, 0, 1, 1, 2], [0], [0]>} : vector<4x8x8xf32>, vector<4x8x4xf32>, vector<4x8x4xf32> -> vector<4x8x4xf32>
    "tpu.trace_stop"() : () -> ()
    %28 = arith.addf %26, %27 : vector<4x8x4xf32>
    %c0_25 = arith.constant 0 : index
    %c0_26 = arith.constant 0 : index
    %c0_27 = arith.constant 0 : index
    %29 = vector.load %arg9[%c0_25, %c0_26, %c0_27] : memref<4x8x4xf32, #tpu.memory_space<vmem>>, vector<4x8x4xf32>
    tpu.vector_store %arg9[%c0_25, %c0_26, %c0_27], %28 {strides = array<i32>} : memref<4x8x4xf32, #tpu.memory_space<vmem>>, vector<4x8x4xf32>,
    %c0_28 = arith.constant 0 : index
    %c0_29 = arith.constant 0 : index
    %c0_30 = arith.constant 0 : index
    %30 = vector.load %arg7[%c0_28, %c0_29, %c0_30] : memref<4x8x1xf32, #tpu.memory_space<vmem>>, vector<4x8x1xf32>
    tpu.vector_store %arg7[%c0_28, %c0_29, %c0_30], %12 {strides = array<i32>} : memref<4x8x1xf32, #tpu.memory_space<vmem>>, vector<4x8x1xf32>,
    %c0_i32_31 = arith.constant 0 : i32
    %31 = arith.cmpi eq, %arg2, %c0_i32_31 : i32
    %32 = arith.extui %31 : i1 to i32
    %c0_i32_32 = arith.constant 0 : i32
    %33 = arith.cmpi ne, %32, %c0_i32_32 : i32
    scf.if %33 {
      %c0_33 = arith.constant 0 : index
      %c0_34 = arith.constant 0 : index
      %c0_35 = arith.constant 0 : index
      %34 = vector.load %arg8[%c0_33, %c0_34, %c0_35] : memref<4x8x1xf32, #tpu.memory_space<vmem>>, vector<4x8x1xf32>
      %35 = tpu.reciprocal %34 {approx = true} : vector<4x8x1xf32> -> vector<4x8x1xf32>
      %c0_36 = arith.constant 0 : index
      %c0_37 = arith.constant 0 : index
      %c0_38 = arith.constant 0 : index
      %36 = vector.load %arg9[%c0_36, %c0_37, %c0_38] : memref<4x8x4xf32, #tpu.memory_space<vmem>>, vector<4x8x4xf32>
      %37 = vector.broadcast %35 : vector<4x8x1xf32> to vector<4x8x4xf32>
      %38 = arith.mulf %36, %37 : vector<4x8x4xf32>
      %c0_39 = arith.constant 0 : index
      %c0_40 = arith.constant 0 : index
      %c0_41 = arith.constant 0 : index
      %39 = vector.load %arg6[%c0_39, %c0_40, %c0_41] : memref<4x8x4xf32, #tpu.memory_space<vmem>>, vector<4x8x4xf32>
      tpu.vector_store %arg6[%c0_39, %c0_40, %c0_41], %38 {strides = array<i32>} : memref<4x8x4xf32, #tpu.memory_space<vmem>>, vector<4x8x4xf32>,
    } else {
    }
    return
  }
  func.func @transform_0(%arg0: i32, %arg1: i32, %arg2: i32) -> (i32, i32, i32) {
    %c0_i32 = arith.constant 0 : i32
    %c0_i32_0 = arith.constant 0 : i32
    return %arg0, %arg1, %c0_i32 : i32, i32, i32
  }
  func.func @transform_1(%arg0: i32, %arg1: i32, %arg2: i32) -> (i32, i32, i32) {
    %c0_i32 = arith.constant 0 : i32
    %c0_i32_0 = arith.constant 0 : i32
    return %arg0, %arg2, %c0_i32 : i32, i32, i32
  }
  func.func @transform_2(%arg0: i32, %arg1: i32, %arg2: i32) -> (i32, i32, i32) {
    %c0_i32 = arith.constant 0 : i32
    %c0_i32_0 = arith.constant 0 : i32
    return %arg0, %arg2, %c0_i32 : i32, i32, i32
  }
  func.func @transform_3(%arg0: i32, %arg1: i32, %arg2: i32) -> (i32, i32, i32) {
    %c0_i32 = arith.constant 0 : i32
    %c0_i32_0 = arith.constant 0 : i32
    return %arg0, %arg1, %c0_i32 : i32, i32, i32
  }
}

</mosaic_0001>

<llo_original>
// kernel: tpu_custom_call.1
$region0: #{tpu_custom_call.1}
  #allocation0 [shape = 'u32[]', space=smem, size = 0x4, offset = 0x4, fixed_abs, tag = 'smem constant byte address 0x4 - core index']
  #allocation1 [shape = 'u32[144,128]{1,0:T(1,128)}', space=vmem, size = 0x12000, scoped, tag = 'internal scratch']
  #allocation2 [shape = 'f32[4,8,1]{2,1,0:T(8,128)}', space=vmem, size = 0x4000, scoped, tag = 'scratch operand']
  #allocation3 [shape = 'f32[4,8,1]{2,1,0:T(8,128)}', space=vmem, size = 0x4000, scoped, tag = 'scratch operand']
  #allocation4 [shape = 'f32[4,8,4]{2,1,0:T(8,128)}', space=vmem, size = 0x4000, scoped, tag = 'scratch operand']
  %s0 = inlined_call_operand.vmem [shape: f32[4,8,4], index: 0, kind: input, shape index: {}]
  %s1 = inlined_call_operand.vmem [shape: f32[4,8,4], index: 1, kind: input, shape index: {}]
  %s2 = inlined_call_operand.vmem [shape: f32[4,8,4], index: 2, kind: input, shape index: {}]
  %s3 = inlined_call_operand.vmem [shape: f32[4,8,4], index: 3, kind: output, shape index: {}]
  %s4 = sld [smem:[#allocation0]]
  $region30: #{tpu_custom_call.1} parent=0
    _
  %s6 = ssub.s32 1, %s4
  %s7 = scalar_select 0, %s6, %s4
  // Predicated region
  $region2: #{tpu_custom_call.1} parent=0 // pred_check
    _
  $region3: #{tpu_custom_call.1} parent=0 // pred_check_branch
    %9 = sbr.rel (0) target = $region5
  $region4: #{tpu_custom_call.1} parent=0 // pred_region
    _
  $region5: #{tpu_custom_call.1} parent=0 // pred_fallthru
    _
  // Predicated region
  $region6: #{tpu_custom_call.1} parent=0 // pred_check
    _
  $region7: #{tpu_custom_call.1} parent=0 // pred_check_branch
    %11 = sbr.rel (0) target = $region9
  $region8: #{tpu_custom_call.1} parent=0 // pred_region
    _
  $region9: #{tpu_custom_call.1} parent=0 // pred_fallthru
    _
  // Predicated region
  $region10: #{tpu_custom_call.1} parent=0 // pred_check
    _
  $region11: #{tpu_custom_call.1} parent=0 // pred_check_branch
    %13 = sbr.rel (0) target = $region13
  $region12: #{tpu_custom_call.1} parent=0 // pred_region
    _
  $region13: #{tpu_custom_call.1} parent=0 // pred_fallthru
    _
  %p14 = scmp.eq.s32.totalorder 0, 0
  // Predicated region
  $region14: #{tpu_custom_call.1} parent=0 // pred_check
    %p15 = pneg %p14
  $region15: #{tpu_custom_call.1} parent=0 // pred_check_branch
    %17 = sbr.rel (%p15) target = $region17
  $region16: #{tpu_custom_call.1} parent=0 // pred_region
    %vm18 = vcmask 7168
    %19 = vst.msk [vmem:[#allocation2] sm:$0xff] %vm18, -1e+30
    %20 = vst.msk [vmem:[#allocation2 + $0x8] sm:$0xff] %vm18, -1e+30
    %21 = vst.msk [vmem:[#allocation2 + $0x10] sm:$0xff] %vm18, -1e+30
    %22 = vst.msk [vmem:[#allocation2 + $0x18] sm:$0xff] %vm18, -1e+30
    %23 = vst.msk [vmem:[#allocation3] sm:$0xff] %vm18, 0.0
    %24 = vst.msk [vmem:[#allocation3 + $0x8] sm:$0xff] %vm18, 0.0
    %25 = vst.msk [vmem:[#allocation3 + $0x10] sm:$0xff] %vm18, 0.0
    %26 = vst.msk [vmem:[#allocation3 + $0x18] sm:$0xff] %vm18, 0.0
    %vm27 = vcmask 31744
    %28 = vst.msk [vmem:[#allocation4] sm:$0xff] %vm27, 0.0
    %29 = vst.msk [vmem:[#allocation4 + $0x8] sm:$0xff] %vm27, 0.0
    %30 = vst.msk [vmem:[#allocation4 + $0x10] sm:$0xff] %vm27, 0.0
    %31 = vst.msk [vmem:[#allocation4 + $0x18] sm:$0xff] %vm27, 0.0
  $region17: #{tpu_custom_call.1} parent=0 // pred_fallthru
    _
  %v32 = vld [vmem:[%s0] sm:$0xff]
  %v33 = vld [vmem:[%s0 + $0x8] sm:$0xff]
  %v34 = vld [vmem:[%s0 + $0x10] sm:$0xff]
  %v35 = vld [vmem:[%s0 + $0x18] sm:$0xff]
  %v36 = vld [vmem:[%s1] sm:$0xff]
  %v37 = vld [vmem:[%s1 + $0x8] sm:$0xff]
  %v38 = vld [vmem:[%s1 + $0x10] sm:$0xff]
  %v39 = vld [vmem:[%s1 + $0x18] sm:$0xff]
  %v40 = vld [vmem:[%s2] sm:$0xff]
  %v41 = vld [vmem:[%s2 + $0x8] sm:$0xff]
  %v42 = vld [vmem:[%s2 + $0x10] sm:$0xff]
  %v43 = vld [vmem:[%s2 + $0x18] sm:$0xff]
  %vm44 = vcmask 31744
  %v46 = vsel %vm44, %v32, 0
  %v49 = vsel %vm44, %v36, 0
  %51 = vmatprep.subr.mxu0 0.0
  %52 = vmatpush1.xpose.msra.mxu0 %v49
  %53 = vmatprep.subr.mxu0 0.0
  %54 = vmatpush1.xpose.msra.mxu0 0.0
  %55 = vmatprep.subr.mxu0 0.0
  %56 = vmatpush1.xpose.msra.mxu0 0.0
  %57 = vmatprep.subr.mxu0 0.0
  %58 = vmatpush1.xpose.msra.mxu0 0.0
  %59 = vmatprep.subr.mxu0 0.0
  %60 = vmatpush1.xpose.msra.mxu0 0.0
  %61 = vmatprep.subr.mxu0 0.0
  %62 = vmatpush1.xpose.msra.mxu0 0.0
  %63 = vmatprep.subr.mxu0 0.0
  %64 = vmatpush1.xpose.msra.mxu0 0.0
  %65 = vmatprep.subr.mxu0 0.0
  %66 = vmatpush1.xpose.msra.mxu0 0.0
  %67 = vmatprep.subr.mxu0 0.0
  %68 = vmatpush1.xpose.msra.mxu0 0.0
  %69 = vmatprep.subr.mxu0 0.0
  %70 = vmatpush1.xpose.msra.mxu0 0.0
  %71 = vmatprep.subr.mxu0 0.0
  %72 = vmatpush1.xpose.msra.mxu0 0.0
  %73 = vmatprep.subr.mxu0 0.0
  %74 = vmatpush1.xpose.msra.mxu0 0.0
  %75 = vmatprep.subr.mxu0 0.0
  %76 = vmatpush1.xpose.msra.mxu0 0.0
  %77 = vmatprep.subr.mxu0 0.0
  %78 = vmatpush1.xpose.msra.mxu0 0.0
  %79 = vmatprep.subr.mxu0 0.0
  %80 = vmatpush1.xpose.msra.mxu0 0.0
  %81 = vmatprep.subr.mxu0 0.0
  %82 = vmatpush1.xpose.msra.mxu0 0.0
  %83 = vmatprep.subr.mxu0 0.0
  %84 = vmatpush1.xpose.msra.mxu0 0.0
  %85 = vmatprep.subr.mxu0 0.0
  %86 = vmatpush1.xpose.msra.mxu0 0.0
  %87 = vmatprep.subr.mxu0 0.0
  %88 = vmatpush1.xpose.msra.mxu0 0.0
  %89 = vmatprep.subr.mxu0 0.0
  %90 = vmatpush1.xpose.msra.mxu0 0.0
  %91 = vmatprep.subr.mxu0 0.0
  %92 = vmatpush1.xpose.msra.mxu0 0.0
  %93 = vmatprep.subr.mxu0 0.0
  %94 = vmatpush1.xpose.msra.mxu0 0.0
  %95 = vmatprep.subr.mxu0 0.0
  %96 = vmatpush1.xpose.msra.mxu0 0.0
  %97 = vmatprep.subr.mxu0 0.0
  %98 = vmatpush1.xpose.msra.mxu0 0.0
  %99 = vmatprep.subr.mxu0 0.0
  %100 = vmatpush1.xpose.msra.mxu0 0.0
  %101 = vmatprep.subr.mxu0 0.0
  %102 = vmatpush1.xpose.msra.mxu0 0.0
  %103 = vmatprep.subr.mxu0 0.0
  %104 = vmatpush1.xpose.msra.mxu0 0.0
  %105 = vmatprep.subr.mxu0 0.0
  %106 = vmatpush1.xpose.msra.mxu0 0.0
  %107 = vmatprep.subr.mxu0 0.0
  %108 = vmatpush1.xpose.msra.mxu0 0.0
  %109 = vmatprep.subr.mxu0 0.0
  %110 = vmatpush1.xpose.msra.mxu0 0.0
  %111 = vmatprep.subr.mxu0 0.0
  %112 = vmatpush1.xpose.msra.mxu0 0.0
  %113 = vmatprep.subr.mxu0 0.0
  %114 = vmatpush1.xpose.msra.mxu0 0.0
  %115 = vmatprep.mubr.f32.mxu0 0.0
  %116 = vmatmul.mubr.f32.gmra.mrb[0].mxu0 %v46
  %v117 = vpop.f32.mrb[0].mxu0
  %v118 = vadd.f32 0.0, %v117
  %v119 = vpop.f32.mrb[0].mxu0
  %120 = vdwg.mxu0
  %v122 = vsel %vm44, %v33, 0
  %v125 = vsel %vm44, %v37, 0
  %127 = vmatprep.subr.mxu0 0.0
  %128 = vmatpush1.xpose.msra.mxu0 %v125
  %129 = vmatprep.subr.mxu0 0.0
  %130 = vmatpush1.xpose.msra.mxu0 0.0
  %131 = vmatprep.subr.mxu0 0.0
  %132 = vmatpush1.xpose.msra.mxu0 0.0
  %133 = vmatprep.subr.mxu0 0.0
  %134 = vmatpush1.xpose.msra.mxu0 0.0
  %135 = vmatprep.subr.mxu0 0.0
  %136 = vmatpush1.xpose.msra.mxu0 0.0
  %137 = vmatprep.subr.mxu0 0.0
  %138 = vmatpush1.xpose.msra.mxu0 0.0
  %139 = vmatprep.subr.mxu0 0.0
  %140 = vmatpush1.xpose.msra.mxu0 0.0
  %141 = vmatprep.subr.mxu0 0.0
  %142 = vmatpush1.xpose.msra.mxu0 0.0
  %143 = vmatprep.subr.mxu0 0.0
  %144 = vmatpush1.xpose.msra.mxu0 0.0
  %145 = vmatprep.subr.mxu0 0.0
  %146 = vmatpush1.xpose.msra.mxu0 0.0
  %147 = vmatprep.subr.mxu0 0.0
  %148 = vmatpush1.xpose.msra.mxu0 0.0
  %149 = vmatprep.subr.mxu0 0.0
  %150 = vmatpush1.xpose.msra.mxu0 0.0
  %151 = vmatprep.subr.mxu0 0.0
  %152 = vmatpush1.xpose.msra.mxu0 0.0
  %153 = vmatprep.subr.mxu0 0.0
  %154 = vmatpush1.xpose.msra.mxu0 0.0
  %155 = vmatprep.subr.mxu0 0.0
  %156 = vmatpush1.xpose.msra.mxu0 0.0
  %157 = vmatprep.subr.mxu0 0.0
  %158 = vmatpush1.xpose.msra.mxu0 0.0
  %159 = vmatprep.subr.mxu0 0.0
  %160 = vmatpush1.xpose.msra.mxu0 0.0
  %161 = vmatprep.subr.mxu0 0.0
  %162 = vmatpush1.xpose.msra.mxu0 0.0
  %163 = vmatprep.subr.mxu0 0.0
  %164 = vmatpush1.xpose.msra.mxu0 0.0
  %165 = vmatprep.subr.mxu0 0.0
  %166 = vmatpush1.xpose.msra.mxu0 0.0
  %167 = vmatprep.subr.mxu0 0.0
  %168 = vmatpush1.xpose.msra.mxu0 0.0
  %169 = vmatprep.subr.mxu0 0.0
  %170 = vmatpush1.xpose.msra.mxu0 0.0
  %171 = vmatprep.subr.mxu0 0.0
  %172 = vmatpush1.xpose.msra.mxu0 0.0
  %173 = vmatprep.subr.mxu0 0.0
  %174 = vmatpush1.xpose.msra.mxu0 0.0
  %175 = vmatprep.subr.mxu0 0.0
  %176 = vmatpush1.xpose.msra.mxu0 0.0
  %177 = vmatprep.subr.mxu0 0.0
  %178 = vmatpush1.xpose.msra.mxu0 0.0
  %179 = vmatprep.subr.mxu0 0.0
  %180 = vmatpush1.xpose.msra.mxu0 0.0
  %181 = vmatprep.subr.mxu0 0.0
  %182 = vmatpush1.xpose.msra.mxu0 0.0
  %183 = vmatprep.subr.mxu0 0.0
  %184 = vmatpush1.xpose.msra.mxu0 0.0
  %185 = vmatprep.subr.mxu0 0.0
  %186 = vmatpush1.xpose.msra.mxu0 0.0
  %187 = vmatprep.subr.mxu0 0.0
  %188 = vmatpush1.xpose.msra.mxu0 0.0
  %189 = vmatprep.subr.mxu0 0.0
  %190 = vmatpush1.xpose.msra.mxu0 0.0
  %191 = vmatprep.mubr.f32.mxu0 0.0
  %192 = vmatmul.mubr.f32.gmra.mrb[0].mxu0 %v122
  %v193 = vpop.f32.mrb[0].mxu0
  %v194 = vadd.f32 0.0, %v193
  %v195 = vpop.f32.mrb[0].mxu0
  %196 = vdwg.mxu0
  %v198 = vsel %vm44, %v34, 0
  %v201 = vsel %vm44, %v38, 0
  %203 = vmatprep.subr.mxu0 0.0
  %204 = vmatpush1.xpose.msra.mxu0 %v201
  %205 = vmatprep.subr.mxu0 0.0
  %206 = vmatpush1.xpose.msra.mxu0 0.0
  %207 = vmatprep.subr.mxu0 0.0
  %208 = vmatpush1.xpose.msra.mxu0 0.0
  %209 = vmatprep.subr.mxu0 0.0
  %210 = vmatpush1.xpose.msra.mxu0 0.0
  %211 = vmatprep.subr.mxu0 0.0
  %212 = vmatpush1.xpose.msra.mxu0 0.0
  %213 = vmatprep.subr.mxu0 0.0
  %214 = vmatpush1.xpose.msra.mxu0 0.0
  %215 = vmatprep.subr.mxu0 0.0
  %216 = vmatpush1.xpose.msra.mxu0 0.0
  %217 = vmatprep.subr.mxu0 0.0
  %218 = vmatpush1.xpose.msra.mxu0 0.0
  %219 = vmatprep.subr.mxu0 0.0
  %220 = vmatpush1.xpose.msra.mxu0 0.0
  %221 = vmatprep.subr.mxu0 0.0
  %222 = vmatpush1.xpose.msra.mxu0 0.0
  %223 = vmatprep.subr.mxu0 0.0
  %224 = vmatpush1.xpose.msra.mxu0 0.0
  %225 = vmatprep.subr.mxu0 0.0
  %226 = vmatpush1.xpose.msra.mxu0 0.0
  %227 = vmatprep.subr.mxu0 0.0
  %228 = vmatpush1.xpose.msra.mxu0 0.0
  %229 = vmatprep.subr.mxu0 0.0
  %230 = vmatpush1.xpose.msra.mxu0 0.0
  %231 = vmatprep.subr.mxu0 0.0
  %232 = vmatpush1.xpose.msra.mxu0 0.0
  %233 = vmatprep.subr.mxu0 0.0
  %234 = vmatpush1.xpose.msra.mxu0 0.0
  %235 = vmatprep.subr.mxu0 0.0
  %236 = vmatpush1.xpose.msra.mxu0 0.0
  %237 = vmatprep.subr.mxu0 0.0
  %238 = vmatpush1.xpose.msra.mxu0 0.0
  %239 = vmatprep.subr.mxu0 0.0
  %240 = vmatpush1.xpose.msra.mxu0 0.0
  %241 = vmatprep.subr.mxu0 0.0
  %242 = vmatpush1.xpose.msra.mxu0 0.0
  %243 = vmatprep.subr.mxu0 0.0
  %244 = vmatpush1.xpose.msra.mxu0 0.0
  %245 = vmatprep.subr.mxu0 0.0
  %246 = vmatpush1.xpose.msra.mxu0 0.0
  %247 = vmatprep.subr.mxu0 0.0
  %248 = vmatpush1.xpose.msra.mxu0 0.0
  %249 = vmatprep.subr.mxu0 0.0
  %250 = vmatpush1.xpose.msra.mxu0 0.0
  %251 = vmatprep.subr.mxu0 0.0
  %252 = vmatpush1.xpose.msra.mxu0 0.0
  %253 = vmatprep.subr.mxu0 0.0
  %254 = vmatpush1.xpose.msra.mxu0 0.0
  %255 = vmatprep.subr.mxu0 0.0
  %256 = vmatpush1.xpose.msra.mxu0 0.0
  %257 = vmatprep.subr.mxu0 0.0
  %258 = vmatpush1.xpose.msra.mxu0 0.0
  %259 = vmatprep.subr.mxu0 0.0
  %260 = vmatpush1.xpose.msra.mxu0 0.0
  %261 = vmatprep.subr.mxu0 0.0
  %262 = vmatpush1.xpose.msra.mxu0 0.0
  %263 = vmatprep.subr.mxu0 0.0
  %264 = vmatpush1.xpose.msra.mxu0 0.0
  %265 = vmatprep.subr.mxu0 0.0
  %266 = vmatpush1.xpose.msra.mxu0 0.0
  %267 = vmatprep.mubr.f32.mxu0 0.0
  %268 = vmatmul.mubr.f32.gmra.mrb[0].mxu0 %v198
  %v269 = vpop.f32.mrb[0].mxu0
  %v270 = vadd.f32 0.0, %v269
  %v271 = vpop.f32.mrb[0].mxu0
  %272 = vdwg.mxu0
  %v274 = vsel %vm44, %v35, 0
  %v277 = vsel %vm44, %v39, 0
  %279 = vmatprep.subr.mxu0 0.0
  %280 = vmatpush1.xpose.msra.mxu0 %v277
  %281 = vmatprep.subr.mxu0 0.0
  %282 = vmatpush1.xpose.msra.mxu0 0.0
  %283 = vmatprep.subr.mxu0 0.0
  %284 = vmatpush1.xpose.msra.mxu0 0.0
  %285 = vmatprep.subr.mxu0 0.0
  %286 = vmatpush1.xpose.msra.mxu0 0.0
  %287 = vmatprep.subr.mxu0 0.0
  %288 = vmatpush1.xpose.msra.mxu0 0.0
  %289 = vmatprep.subr.mxu0 0.0
  %290 = vmatpush1.xpose.msra.mxu0 0.0
  %291 = vmatprep.subr.mxu0 0.0
  %292 = vmatpush1.xpose.msra.mxu0 0.0
  %293 = vmatprep.subr.mxu0 0.0
  %294 = vmatpush1.xpose.msra.mxu0 0.0
  %295 = vmatprep.subr.mxu0 0.0
  %296 = vmatpush1.xpose.msra.mxu0 0.0
  %297 = vmatprep.subr.mxu0 0.0
  %298 = vmatpush1.xpose.msra.mxu0 0.0
  %299 = vmatprep.subr.mxu0 0.0
  %300 = vmatpush1.xpose.msra.mxu0 0.0
  %301 = vmatprep.subr.mxu0 0.0
  %302 = vmatpush1.xpose.msra.mxu0 0.0
  %303 = vmatprep.subr.mxu0 0.0
  %304 = vmatpush1.xpose.msra.mxu0 0.0
  %305 = vmatprep.subr.mxu0 0.0
  %306 = vmatpush1.xpose.msra.mxu0 0.0
  %307 = vmatprep.subr.mxu0 0.0
  %308 = vmatpush1.xpose.msra.mxu0 0.0
  %309 = vmatprep.subr.mxu0 0.0
  %310 = vmatpush1.xpose.msra.mxu0 0.0
  %311 = vmatprep.subr.mxu0 0.0
  %312 = vmatpush1.xpose.msra.mxu0 0.0
  %313 = vmatprep.subr.mxu0 0.0
  %314 = vmatpush1.xpose.msra.mxu0 0.0
  %315 = vmatprep.subr.mxu0 0.0
  %316 = vmatpush1.xpose.msra.mxu0 0.0
  %317 = vmatprep.subr.mxu0 0.0
  %318 = vmatpush1.xpose.msra.mxu0 0.0
  %319 = vmatprep.subr.mxu0 0.0
  %320 = vmatpush1.xpose.msra.mxu0 0.0
  %321 = vmatprep.subr.mxu0 0.0
  %322 = vmatpush1.xpose.msra.mxu0 0.0
  %323 = vmatprep.subr.mxu0 0.0
  %324 = vmatpush1.xpose.msra.mxu0 0.0
  %325 = vmatprep.subr.mxu0 0.0
  %326 = vmatpush1.xpose.msra.mxu0 0.0
  %327 = vmatprep.subr.mxu0 0.0
  %328 = vmatpush1.xpose.msra.mxu0 0.0
  %329 = vmatprep.subr.mxu0 0.0
  %330 = vmatpush1.xpose.msra.mxu0 0.0
  %331 = vmatprep.subr.mxu0 0.0
  %332 = vmatpush1.xpose.msra.mxu0 0.0
  %333 = vmatprep.subr.mxu0 0.0
  %334 = vmatpush1.xpose.msra.mxu0 0.0
  %335 = vmatprep.subr.mxu0 0.0
  %336 = vmatpush1.xpose.msra.mxu0 0.0
  %337 = vmatprep.subr.mxu0 0.0
  %338 = vmatpush1.xpose.msra.mxu0 0.0
  %339 = vmatprep.subr.mxu0 0.0
  %340 = vmatpush1.xpose.msra.mxu0 0.0
  %341 = vmatprep.subr.mxu0 0.0
  %342 = vmatpush1.xpose.msra.mxu0 0.0
  %343 = vmatprep.mubr.f32.mxu0 0.0
  %344 = vmatmul.mubr.f32.gmra.mrb[0].mxu0 %v274
  %v345 = vpop.f32.mrb[0].mxu0
  %v346 = vadd.f32 0.0, %v345
  %v347 = vpop.f32.mrb[0].mxu0
  %348 = vdwg.mxu0
  %v349 = vmul.f32 %v118, 0.5
  %v350 = vmul.f32 %v194, 0.5
  %v351 = vmul.f32 %v270, 0.5
  %v352 = vmul.f32 %v346, 0.5
  %v353 = vld [vmem:[#allocation2] sm:$0xff]
  %v354 = vld [vmem:[#allocation2 + $0x8] sm:$0xff]
  %v355 = vld [vmem:[#allocation2 + $0x10] sm:$0xff]
  %v356 = vld [vmem:[#allocation2 + $0x18] sm:$0xff]
  %vm357 = vcmask 64512
  %v358 = vsel %vm357, %v349, -inf
  %359 = vmax.xlane.f32.xlu0 %v358
  %v360 = vpop.xlane.xlu0 %359
  %v361 = vsel %vm357, %v350, -inf
  %362 = vmax.xlane.f32.xlu0 %v361
  %v363 = vpop.xlane.xlu0 %362
  %v364 = vsel %vm357, %v351, -inf
  %365 = vmax.xlane.f32.xlu0 %v364
  %v366 = vpop.xlane.xlu0 %365
  %v367 = vsel %vm357, %v352, -inf
  %368 = vmax.xlane.f32.xlu0 %v367
  %v369 = vpop.xlane.xlu0 %368
  %v370 = vmax.f32 %v353, %v360
  %v371 = vmax.f32 %v354, %v363
  %v372 = vmax.f32 %v355, %v366
  %v373 = vmax.f32 %v356, %v369
  %v374 = vsub.f32 %v353, %v370
  %v375 = vsub.f32 %v354, %v371
  %v376 = vsub.f32 %v355, %v372
  %v377 = vsub.f32 %v356, %v373
  %v378 = vmul.f32 %v374, 1.442695
  %v379 = vpow.pop %v378
  %v380 = vmul.f32 %v375, 1.442695
  %v381 = vpow.pop %v380
  %v382 = vmul.f32 %v376, 1.442695
  %v383 = vpow.pop %v382
  %v384 = vmul.f32 %v377, 1.442695
  %v385 = vpow.pop %v384
  %387 = vset.pattern.permute.xlu0 0
  %388 = vperm.xlu0 %387, %v370
  %v389 = vpop.permute.xlu0 %388
  %392 = vset.pattern.permute.xlu0 0
  %393 = vperm.xlu0 %392, %v371
  %v394 = vpop.permute.xlu0 %393
  %397 = vset.pattern.permute.xlu0 0
  %398 = vperm.xlu0 %397, %v372
  %v399 = vpop.permute.xlu0 %398
  %402 = vset.pattern.permute.xlu0 0
  %403 = vperm.xlu0 %402, %v373
  %v404 = vpop.permute.xlu0 %403
  %v406 = vsub.f32 %v349, %v389
  %v407 = vsub.f32 %v350, %v394
  %v408 = vsub.f32 %v351, %v399
  %v409 = vsub.f32 %v352, %v404
  %v410 = vmul.f32 %v406, 1.442695
  %v411 = vpow.pop %v410
  %v412 = vmul.f32 %v407, 1.442695
  %v413 = vpow.pop %v412
  %v414 = vmul.f32 %v408, 1.442695
  %v415 = vpow.pop %v414
  %v416 = vmul.f32 %v409, 1.442695
  %v417 = vpow.pop %v416
  %v418 = vld [vmem:[#allocation3] sm:$0xff]
  %v419 = vld [vmem:[#allocation3 + $0x8] sm:$0xff]
  %v420 = vld [vmem:[#allocation3 + $0x10] sm:$0xff]
  %v421 = vld [vmem:[#allocation3 + $0x18] sm:$0xff]
  %v422 = vmul.f32 %v379, %v418
  %v423 = vmul.f32 %v381, %v419
  %v424 = vmul.f32 %v383, %v420
  %v425 = vmul.f32 %v385, %v421
  %v426 = vsel %vm357, %v411, 0.0
  %427 = vadd.xlane.f32.xlu0 %v426
  %v428 = vpop.xlane.xlu0 %427
  %v429 = vsel %vm357, %v413, 0.0
  %430 = vadd.xlane.f32.xlu0 %v429
  %v431 = vpop.xlane.xlu0 %430
  %v432 = vsel %vm357, %v415, 0.0
  %433 = vadd.xlane.f32.xlu0 %v432
  %v434 = vpop.xlane.xlu0 %433
  %v435 = vsel %vm357, %v417, 0.0
  %436 = vadd.xlane.f32.xlu0 %v435
  %v437 = vpop.xlane.xlu0 %436
  %v438 = vadd.f32 %v422, %v428
  %v439 = vadd.f32 %v423, %v431
  %v440 = vadd.f32 %v424, %v434
  %v441 = vadd.f32 %v425, %v437
  %vm442 = vcmask 7168
  %443 = vst.msk [vmem:[#allocation3] sm:$0xff] %vm442, %v438
  %444 = vst.msk [vmem:[#allocation3 + $0x8] sm:$0xff] %vm442, %v439
  %445 = vst.msk [vmem:[#allocation3 + $0x10] sm:$0xff] %vm442, %v440
  %446 = vst.msk [vmem:[#allocation3 + $0x18] sm:$0xff] %vm442, %v441
  %v447 = vld [vmem:[#allocation4] sm:$0xff]
  %v448 = vld [vmem:[#allocation4 + $0x8] sm:$0xff]
  %v449 = vld [vmem:[#allocation4 + $0x10] sm:$0xff]
  %v450 = vld [vmem:[#allocation4 + $0x18] sm:$0xff]
  %452 = vset.pattern.permute.xlu0 0
  %453 = vperm.xlu0 %452, %v379
  %v454 = vpop.permute.xlu0 %453
  %457 = vset.pattern.permute.xlu0 0
  %458 = vperm.xlu0 %457, %v381
  %v459 = vpop.permute.xlu0 %458
  %462 = vset.pattern.permute.xlu0 0
  %463 = vperm.xlu0 %462, %v383
  %v464 = vpop.permute.xlu0 %463
  %467 = vset.pattern.permute.xlu0 0
  %468 = vperm.xlu0 %467, %v385
  %v469 = vpop.permute.xlu0 %468
  %v471 = vmul.f32 %v454, %v447
  %v472 = vmul.f32 %v459, %v448
  %v473 = vmul.f32 %v464, %v449
  %v474 = vmul.f32 %v469, %v450
  %v476 = vsel %vm357, %v411, 0
  %478 = vmatprep.subr.mxu0 0.0
  %479 = vmatpush1.msra.mxu0 %v40
  %480 = vmatprep.subr.mxu0 0.0
  %481 = vmatpush1.msra.mxu0 0.0
  %482 = vmatprep.subr.mxu0 0.0
  %483 = vmatpush1.msra.mxu0 0.0
  %484 = vmatprep.subr.mxu0 0.0
  %485 = vmatpush1.msra.mxu0 0.0
  %486 = vmatprep.subr.mxu0 0.0
  %487 = vmatpush1.msra.mxu0 0.0
  %488 = vmatprep.subr.mxu0 0.0
  %489 = vmatpush1.msra.mxu0 0.0
  %490 = vmatprep.subr.mxu0 0.0
  %491 = vmatpush1.msra.mxu0 0.0
  %492 = vmatprep.subr.mxu0 0.0
  %493 = vmatpush1.msra.mxu0 0.0
  %494 = vmatprep.subr.mxu0 0.0
  %495 = vmatpush1.msra.mxu0 0.0
  %496 = vmatprep.subr.mxu0 0.0
  %497 = vmatpush1.msra.mxu0 0.0
  %498 = vmatprep.subr.mxu0 0.0
  %499 = vmatpush1.msra.mxu0 0.0
  %500 = vmatprep.subr.mxu0 0.0
  %501 = vmatpush1.msra.mxu0 0.0
  %502 = vmatprep.subr.mxu0 0.0
  %503 = vmatpush1.msra.mxu0 0.0
  %504 = vmatprep.subr.mxu0 0.0
  %505 = vmatpush1.msra.mxu0 0.0
  %506 = vmatprep.subr.mxu0 0.0
  %507 = vmatpush1.msra.mxu0 0.0
  %508 = vmatprep.subr.mxu0 0.0
  %509 = vmatpush1.msra.mxu0 0.0
  %510 = vmatprep.subr.mxu0 0.0
  %511 = vmatpush1.msra.mxu0 0.0
  %512 = vmatprep.subr.mxu0 0.0
  %513 = vmatpush1.msra.mxu0 0.0
  %514 = vmatprep.subr.mxu0 0.0
  %515 = vmatpush1.msra.mxu0 0.0
  %516 = vmatprep.subr.mxu0 0.0
  %517 = vmatpush1.msra.mxu0 0.0
  %518 = vmatprep.subr.mxu0 0.0
  %519 = vmatpush1.msra.mxu0 0.0
  %520 = vmatprep.subr.mxu0 0.0
  %521 = vmatpush1.msra.mxu0 0.0
  %522 = vmatprep.subr.mxu0 0.0
  %523 = vmatpush1.msra.mxu0 0.0
  %524 = vmatprep.subr.mxu0 0.0
  %525 = vmatpush1.msra.mxu0 0.0
  %526 = vmatprep.subr.mxu0 0.0
  %527 = vmatpush1.msra.mxu0 0.0
  %528 = vmatprep.subr.mxu0 0.0
  %529 = vmatpush1.msra.mxu0 0.0
  %530 = vmatprep.subr.mxu0 0.0
  %531 = vmatpush1.msra.mxu0 0.0
  %532 = vmatprep.subr.mxu0 0.0
  %533 = vmatpush1.msra.mxu0 0.0
  %534 = vmatprep.subr.mxu0 0.0
  %535 = vmatpush1.msra.mxu0 0.0
  %536 = vmatprep.subr.mxu0 0.0
  %537 = vmatpush1.msra.mxu0 0.0
  %538 = vmatprep.subr.mxu0 0.0
  %539 = vmatpush1.msra.mxu0 0.0
  %540 = vmatprep.subr.mxu0 0.0
  %541 = vmatpush1.msra.mxu0 0.0
  %542 = vmatprep.mubr.f32.mxu0 0.0
  %543 = vmatmul.mubr.f32.gmra.mrb[0].mxu0 %v476
  %v544 = vpop.f32.mrb[0].mxu0
  %v545 = vadd.f32 0.0, %v544
  %v546 = vpop.f32.mrb[0].mxu0
  %547 = vdwg.mxu0
  %v549 = vsel %vm357, %v413, 0
  %551 = vmatprep.subr.mxu0 0.0
  %552 = vmatpush1.msra.mxu0 %v41
  %553 = vmatprep.subr.mxu0 0.0
  %554 = vmatpush1.msra.mxu0 0.0
  %555 = vmatprep.subr.mxu0 0.0
  %556 = vmatpush1.msra.mxu0 0.0
  %557 = vmatprep.subr.mxu0 0.0
  %558 = vmatpush1.msra.mxu0 0.0
  %559 = vmatprep.subr.mxu0 0.0
  %560 = vmatpush1.msra.mxu0 0.0
  %561 = vmatprep.subr.mxu0 0.0
  %562 = vmatpush1.msra.mxu0 0.0
  %563 = vmatprep.subr.mxu0 0.0
  %564 = vmatpush1.msra.mxu0 0.0
  %565 = vmatprep.subr.mxu0 0.0
  %566 = vmatpush1.msra.mxu0 0.0
  %567 = vmatprep.subr.mxu0 0.0
  %568 = vmatpush1.msra.mxu0 0.0
  %569 = vmatprep.subr.mxu0 0.0
  %570 = vmatpush1.msra.mxu0 0.0
  %571 = vmatprep.subr.mxu0 0.0
  %572 = vmatpush1.msra.mxu0 0.0
  %573 = vmatprep.subr.mxu0 0.0
  %574 = vmatpush1.msra.mxu0 0.0
  %575 = vmatprep.subr.mxu0 0.0
  %576 = vmatpush1.msra.mxu0 0.0
  %577 = vmatprep.subr.mxu0 0.0
  %578 = vmatpush1.msra.mxu0 0.0
  %579 = vmatprep.subr.mxu0 0.0
  %580 = vmatpush1.msra.mxu0 0.0
  %581 = vmatprep.subr.mxu0 0.0
  %582 = vmatpush1.msra.mxu0 0.0
  %583 = vmatprep.subr.mxu0 0.0
  %584 = vmatpush1.msra.mxu0 0.0
  %585 = vmatprep.subr.mxu0 0.0
  %586 = vmatpush1.msra.mxu0 0.0
  %587 = vmatprep.subr.mxu0 0.0
  %588 = vmatpush1.msra.mxu0 0.0
  %589 = vmatprep.subr.mxu0 0.0
  %590 = vmatpush1.msra.mxu0 0.0
  %591 = vmatprep.subr.mxu0 0.0
  %592 = vmatpush1.msra.mxu0 0.0
  %593 = vmatprep.subr.mxu0 0.0
  %594 = vmatpush1.msra.mxu0 0.0
  %595 = vmatprep.subr.mxu0 0.0
  %596 = vmatpush1.msra.mxu0 0.0
  %597 = vmatprep.subr.mxu0 0.0
  %598 = vmatpush1.msra.mxu0 0.0
  %599 = vmatprep.subr.mxu0 0.0
  %600 = vmatpush1.msra.mxu0 0.0
  %601 = vmatprep.subr.mxu0 0.0
  %602 = vmatpush1.msra.mxu0 0.0
  %603 = vmatprep.subr.mxu0 0.0
  %604 = vmatpush1.msra.mxu0 0.0
  %605 = vmatprep.subr.mxu0 0.0
  %606 = vmatpush1.msra.mxu0 0.0
  %607 = vmatprep.subr.mxu0 0.0
  %608 = vmatpush1.msra.mxu0 0.0
  %609 = vmatprep.subr.mxu0 0.0
  %610 = vmatpush1.msra.mxu0 0.0
  %611 = vmatprep.subr.mxu0 0.0
  %612 = vmatpush1.msra.mxu0 0.0
  %613 = vmatprep.subr.mxu0 0.0
  %614 = vmatpush1.msra.mxu0 0.0
  %615 = vmatprep.mubr.f32.mxu0 0.0
  %616 = vmatmul.mubr.f32.gmra.mrb[0].mxu0 %v549
  %v617 = vpop.f32.mrb[0].mxu0
  %v618 = vadd.f32 0.0, %v617
  %v619 = vpop.f32.mrb[0].mxu0
  %620 = vdwg.mxu0
  %v622 = vsel %vm357, %v415, 0
  %624 = vmatprep.subr.mxu0 0.0
  %625 = vmatpush1.msra.mxu0 %v42
  %626 = vmatprep.subr.mxu0 0.0
  %627 = vmatpush1.msra.mxu0 0.0
  %628 = vmatprep.subr.mxu0 0.0
  %629 = vmatpush1.msra.mxu0 0.0
  %630 = vmatprep.subr.mxu0 0.0
  %631 = vmatpush1.msra.mxu0 0.0
  %632 = vmatprep.subr.mxu0 0.0
  %633 = vmatpush1.msra.mxu0 0.0
  %634 = vmatprep.subr.mxu0 0.0
  %635 = vmatpush1.msra.mxu0 0.0
  %636 = vmatprep.subr.mxu0 0.0
  %637 = vmatpush1.msra.mxu0 0.0
  %638 = vmatprep.subr.mxu0 0.0
  %639 = vmatpush1.msra.mxu0 0.0
  %640 = vmatprep.subr.mxu0 0.0
  %641 = vmatpush1.msra.mxu0 0.0
  %642 = vmatprep.subr.mxu0 0.0
  %643 = vmatpush1.msra.mxu0 0.0
  %644 = vmatprep.subr.mxu0 0.0
  %645 = vmatpush1.msra.mxu0 0.0
  %646 = vmatprep.subr.mxu0 0.0
  %647 = vmatpush1.msra.mxu0 0.0
  %648 = vmatprep.subr.mxu0 0.0
  %649 = vmatpush1.msra.mxu0 0.0
  %650 = vmatprep.subr.mxu0 0.0
  %651 = vmatpush1.msra.mxu0 0.0
  %652 = vmatprep.subr.mxu0 0.0
  %653 = vmatpush1.msra.mxu0 0.0
  %654 = vmatprep.subr.mxu0 0.0
  %655 = vmatpush1.msra.mxu0 0.0
  %656 = vmatprep.subr.mxu0 0.0
  %657 = vmatpush1.msra.mxu0 0.0
  %658 = vmatprep.subr.mxu0 0.0
  %659 = vmatpush1.msra.mxu0 0.0
  %660 = vmatprep.subr.mxu0 0.0
  %661 = vmatpush1.msra.mxu0 0.0
  %662 = vmatprep.subr.mxu0 0.0
  %663 = vmatpush1.msra.mxu0 0.0
  %664 = vmatprep.subr.mxu0 0.0
  %665 = vmatpush1.msra.mxu0 0.0
  %666 = vmatprep.subr.mxu0 0.0
  %667 = vmatpush1.msra.mxu0 0.0
  %668 = vmatprep.subr.mxu0 0.0
  %669 = vmatpush1.msra.mxu0 0.0
  %670 = vmatprep.subr.mxu0 0.0
  %671 = vmatpush1.msra.mxu0 0.0
  %672 = vmatprep.subr.mxu0 0.0
  %673 = vmatpush1.msra.mxu0 0.0
  %674 = vmatprep.subr.mxu0 0.0
  %675 = vmatpush1.msra.mxu0 0.0
  %676 = vmatprep.subr.mxu0 0.0
  %677 = vmatpush1.msra.mxu0 0.0
  %678 = vmatprep.subr.mxu0 0.0
  %679 = vmatpush1.msra.mxu0 0.0
  %680 = vmatprep.subr.mxu0 0.0
  %681 = vmatpush1.msra.mxu0 0.0
  %682 = vmatprep.subr.mxu0 0.0
  %683 = vmatpush1.msra.mxu0 0.0
  %684 = vmatprep.subr.mxu0 0.0
  %685 = vmatpush1.msra.mxu0 0.0
  %686 = vmatprep.subr.mxu0 0.0
  %687 = vmatpush1.msra.mxu0 0.0
  %688 = vmatprep.mubr.f32.mxu0 0.0
  %689 = vmatmul.mubr.f32.gmra.mrb[0].mxu0 %v622
  %v690 = vpop.f32.mrb[0].mxu0
  %v691 = vadd.f32 0.0, %v690
  %v692 = vpop.f32.mrb[0].mxu0
  %693 = vdwg.mxu0
  %v695 = vsel %vm357, %v417, 0
  %697 = vmatprep.subr.mxu0 0.0
  %698 = vmatpush1.msra.mxu0 %v43
  %699 = vmatprep.subr.mxu0 0.0
  %700 = vmatpush1.msra.mxu0 0.0
  %701 = vmatprep.subr.mxu0 0.0
  %702 = vmatpush1.msra.mxu0 0.0
  %703 = vmatprep.subr.mxu0 0.0
  %704 = vmatpush1.msra.mxu0 0.0
  %705 = vmatprep.subr.mxu0 0.0
  %706 = vmatpush1.msra.mxu0 0.0
  %707 = vmatprep.subr.mxu0 0.0
  %708 = vmatpush1.msra.mxu0 0.0
  %709 = vmatprep.subr.mxu0 0.0
  %710 = vmatpush1.msra.mxu0 0.0
  %711 = vmatprep.subr.mxu0 0.0
  %712 = vmatpush1.msra.mxu0 0.0
  %713 = vmatprep.subr.mxu0 0.0
  %714 = vmatpush1.msra.mxu0 0.0
  %715 = vmatprep.subr.mxu0 0.0
  %716 = vmatpush1.msra.mxu0 0.0
  %717 = vmatprep.subr.mxu0 0.0
  %718 = vmatpush1.msra.mxu0 0.0
  %719 = vmatprep.subr.mxu0 0.0
  %720 = vmatpush1.msra.mxu0 0.0
  %721 = vmatprep.subr.mxu0 0.0
  %722 = vmatpush1.msra.mxu0 0.0
  %723 = vmatprep.subr.mxu0 0.0
  %724 = vmatpush1.msra.mxu0 0.0
  %725 = vmatprep.subr.mxu0 0.0
  %726 = vmatpush1.msra.mxu0 0.0
  %727 = vmatprep.subr.mxu0 0.0
  %728 = vmatpush1.msra.mxu0 0.0
  %729 = vmatprep.subr.mxu0 0.0
  %730 = vmatpush1.msra.mxu0 0.0
  %731 = vmatprep.subr.mxu0 0.0
  %732 = vmatpush1.msra.mxu0 0.0
  %733 = vmatprep.subr.mxu0 0.0
  %734 = vmatpush1.msra.mxu0 0.0
  %735 = vmatprep.subr.mxu0 0.0
  %736 = vmatpush1.msra.mxu0 0.0
  %737 = vmatprep.subr.mxu0 0.0
  %738 = vmatpush1.msra.mxu0 0.0
  %739 = vmatprep.subr.mxu0 0.0
  %740 = vmatpush1.msra.mxu0 0.0
  %741 = vmatprep.subr.mxu0 0.0
  %742 = vmatpush1.msra.mxu0 0.0
  %743 = vmatprep.subr.mxu0 0.0
  %744 = vmatpush1.msra.mxu0 0.0
  %745 = vmatprep.subr.mxu0 0.0
  %746 = vmatpush1.msra.mxu0 0.0
  %747 = vmatprep.subr.mxu0 0.0
  %748 = vmatpush1.msra.mxu0 0.0
  %749 = vmatprep.subr.mxu0 0.0
  %750 = vmatpush1.msra.mxu0 0.0
  %751 = vmatprep.subr.mxu0 0.0
  %752 = vmatpush1.msra.mxu0 0.0
  %753 = vmatprep.subr.mxu0 0.0
  %754 = vmatpush1.msra.mxu0 0.0
  %755 = vmatprep.subr.mxu0 0.0
  %756 = vmatpush1.msra.mxu0 0.0
  %757 = vmatprep.subr.mxu0 0.0
  %758 = vmatpush1.msra.mxu0 0.0
  %759 = vmatprep.subr.mxu0 0.0
  %760 = vmatpush1.msra.mxu0 0.0
  %761 = vmatprep.mubr.f32.mxu0 0.0
  %762 = vmatmul.mubr.f32.gmra.mrb[0].mxu0 %v695
  %v763 = vpop.f32.mrb[0].mxu0
  %v764 = vadd.f32 0.0, %v763
  %v765 = vpop.f32.mrb[0].mxu0
  %766 = vdwg.mxu0
  %v767 = vadd.f32 %v471, %v545
  %v768 = vadd.f32 %v472, %v618
  %v769 = vadd.f32 %v473, %v691
  %v770 = vadd.f32 %v474, %v764
  %771 = vst.msk [vmem:[#allocation4] sm:$0xff] %vm44, %v767
  %772 = vst.msk [vmem:[#allocation4 + $0x8] sm:$0xff] %vm44, %v768
  %773 = vst.msk [vmem:[#allocation4 + $0x10] sm:$0xff] %vm44, %v769
  %774 = vst.msk [vmem:[#allocation4 + $0x18] sm:$0xff] %vm44, %v770
  %775 = vst.msk [vmem:[#allocation2] sm:$0xff] %vm442, %v370
  %776 = vst.msk [vmem:[#allocation2 + $0x8] sm:$0xff] %vm442, %v371
  %777 = vst.msk [vmem:[#allocation2 + $0x10] sm:$0xff] %vm442, %v372
  %778 = vst.msk [vmem:[#allocation2 + $0x18] sm:$0xff] %vm442, %v373
  // Predicated region
  $region18: #{tpu_custom_call.1} parent=0 // pred_check
    %p779 = pneg %p14
  $region19: #{tpu_custom_call.1} parent=0 // pred_check_branch
    %781 = sbr.rel (%p779) target = $region21
  $region20: #{tpu_custom_call.1} parent=0 // pred_region
    %v782 = vld [vmem:[#allocation3] sm:$0xff]
    %v783 = vld [vmem:[#allocation3 + $0x8] sm:$0xff]
    %v784 = vld [vmem:[#allocation3 + $0x10] sm:$0xff]
    %v785 = vld [vmem:[#allocation3 + $0x18] sm:$0xff]
    %v786 = vrcp.pop %v782
    %v787 = vrcp.pop %v783
    %v788 = vrcp.pop %v784
    %v789 = vrcp.pop %v785
    %v790 = vld [vmem:[#allocation4] sm:$0xff]
    %v791 = vld [vmem:[#allocation4 + $0x8] sm:$0xff]
    %v792 = vld [vmem:[#allocation4 + $0x10] sm:$0xff]
    %v793 = vld [vmem:[#allocation4 + $0x18] sm:$0xff]
    %795 = vset.pattern.permute.xlu0 0
    %796 = vperm.xlu0 %795, %v786
    %v797 = vpop.permute.xlu0 %796
    %800 = vset.pattern.permute.xlu0 0
    %801 = vperm.xlu0 %800, %v787
    %v802 = vpop.permute.xlu0 %801
    %805 = vset.pattern.permute.xlu0 0
    %806 = vperm.xlu0 %805, %v788
    %v807 = vpop.permute.xlu0 %806
    %810 = vset.pattern.permute.xlu0 0
    %811 = vperm.xlu0 %810, %v789
    %v812 = vpop.permute.xlu0 %811
    %v814 = vmul.f32 %v790, %v797
    %v815 = vmul.f32 %v791, %v802
    %v816 = vmul.f32 %v792, %v807
    %v817 = vmul.f32 %v793, %v812
    %818 = vst.msk [vmem:[%s3] sm:$0xff] %vm44, %v814
    %819 = vst.msk [vmem:[%s3 + $0x8] sm:$0xff] %vm44, %v815
    %820 = vst.msk [vmem:[%s3 + $0x10] sm:$0xff] %vm44, %v816
    %821 = vst.msk [vmem:[%s3 + $0x18] sm:$0xff] %vm44, %v817
  $region21: #{tpu_custom_call.1} parent=0 // pred_fallthru
    _
  // Predicated region
  $region22: #{tpu_custom_call.1} parent=0 // pred_check
    _
  $region23: #{tpu_custom_call.1} parent=0 // pred_check_branch
    %823 = sbr.rel (0) target = $region25
  $region24: #{tpu_custom_call.1} parent=0 // pred_region
    _
  $region25: #{tpu_custom_call.1} parent=0 // pred_fallthru
    _
  // Predicated region
  $region26: #{tpu_custom_call.1} parent=0 // pred_check
    _
  $region27: #{tpu_custom_call.1} parent=0 // pred_check_branch
    %825 = sbr.rel (0) target = $region29
  $region28: #{tpu_custom_call.1} parent=0 // pred_region
    _
  $region29: #{tpu_custom_call.1} parent=0 // pred_fallthru
    _

</llo_original>
